<compile_context>
chip_gen: v5e
topology: v5e:2x2
jax: 0.10.0
libtpu: 0.0.40
codegen_flags: <defaults>
</compile_context>

<pallas_src>
from functools import partial

import jax
import jax.numpy as jnp
import numpy as np
from jax.experimental import pallas as pl
from jax.experimental.pallas import tpu as pltpu


def _choose_ts(s, c, itemsize, target_bytes, min_lanes):
    """Spatial chunk length: lane-dense (multiple of 128), ~target_bytes per
    (C, TS) block, never below min_lanes; or the full S if that is smaller."""
    ts = (target_bytes // max(1, c * itemsize)) // 128 * 128
    ts = max(ts, max(128, (min_lanes // 128) * 128))
    if ts >= s:
        return s                      # single full-extent chunk (always legal)
    return ts                         # multiple of 128; last chunk may be ragged


def _se_fused_kernel(x_ref, w1_ref, b1_ref, w2_ref, b2_ref, o_ref, *, inv_s):
    # x_ref: (1, C, S)  w1_ref: (Cr, C)  b1_ref: (Cr, 1)
    # w2_ref: (C, Cr)   b2_ref: (C, 1)   o_ref: (1, C, S)
    xs = jnp.sum(x_ref[...].astype(jnp.float32), axis=-1, keepdims=True)  # (1,C,1)
    mean = xs[0] * inv_s                                                  # (C, 1)
    h = jnp.dot(w1_ref[...], mean, precision=jax.lax.Precision.HIGHEST,
                preferred_element_type=jnp.float32) + b1_ref[...]         # (Cr, 1)
    h = jnp.maximum(h, 0.0)
    g = jnp.dot(w2_ref[...], h, precision=jax.lax.Precision.HIGHEST,
                preferred_element_type=jnp.float32) + b2_ref[...]         # (C, 1)
    gate = 1.0 / (1.0 + jnp.exp(-g))                                      # (C, 1)
    # Per-channel gate broadcast over the lane (spatial) axis.
    o_ref[...] = x_ref[...] * gate[None].astype(o_ref.dtype)


def _pool_kernel(x_ref, sum_ref, acc_ref, *, n_inner, n_chunks, rem, c, ts):
    # x_ref: (1, C, TS); sum_ref: (1, 1, C, 1); acc_ref: (1, C, 1) f32 scratch
    o = pl.program_id(1)
    i = pl.program_id(2)

    @pl.when(i == 0)
    def _():
        acc_ref[...] = jnp.zeros_like(acc_ref)

    if rem == 0:
        # S divides evenly into TS chunks: plain lane reduction per chunk.
        acc_ref[...] += jnp.sum(x_ref[...].astype(jnp.float32), axis=-1,
                                keepdims=True)
    else:
        # Ragged tail: the last chunk's OOB lanes contain garbage -> mask them.
        gi = o * n_inner + i            # global spatial-chunk index

        @pl.when(gi < n_chunks - 1)
        def _():
            acc_ref[...] += jnp.sum(x_ref[...].astype(jnp.float32), axis=-1,
                                    keepdims=True)

        @pl.when(gi == n_chunks - 1)
        def _():
            lane = jax.lax.broadcasted_iota(jnp.int32, (1, c, ts), 2)
            xm = jnp.where(lane < rem, x_ref[...].astype(jnp.float32), 0.0)
            acc_ref[...] += jnp.sum(xm, axis=-1, keepdims=True)

    @pl.when(i == n_inner - 1)
    def _():
        sum_ref[...] = acc_ref[...][:, None]          # (1, 1, C, 1)


def _scale_kernel(x_ref, gate_ref, o_ref):
    # x_ref: (1, C, TS); gate_ref: (1, C, 1) (already x dtype); o_ref: (1, C, TS)
    o_ref[...] = x_ref[...] * gate_ref[...]


def se_module(x, w1, b1, w2, b2, *,
              block_spatial_bytes=6 << 20,
              fast_path_bytes=6 << 20,
              min_lanes=512,
              vmem_limit_bytes=48 << 20):
    """SEModule forward.  x: (N, C, D, H, W); w1: (Cr, C); b1: (Cr,);
    w2: (C, Cr); b2: (C,).  Returns (N, C, D, H, W)."""
    N, C, D, H, W = x.shape
    Cr = w1.shape[0]
    S = D * H * W
    itemsize = jnp.dtype(x.dtype).itemsize
    inv_s = 1.0 / float(S)

    xf = x.reshape(N, C, S)              # free view for contiguous NCDHW input

    # ---------- fused single-pass path: 1 read + 1 write of |x| ----------
    if C * S * itemsize <= fast_path_bytes:
        w1c = jnp.asarray(w1, jnp.float32)                  # (Cr, C)
        w2c = jnp.asarray(w2, jnp.float32)                  # (C, Cr)
        b1c = jnp.asarray(b1, jnp.float32).reshape(Cr, 1)
        b2c = jnp.asarray(b2, jnp.float32).reshape(C, 1)
        yf = pl.pallas_call(
            partial(_se_fused_kernel, inv_s=inv_s),
            out_shape=jax.ShapeDtypeStruct((N, C, S), x.dtype),
            grid=(N,),
            in_specs=[
                pl.BlockSpec((1, C, S), lambda n: (n, 0, 0)),
                pl.BlockSpec((Cr, C), lambda n: (0, 0)),
                pl.BlockSpec((Cr, 1), lambda n: (0, 0)),
                pl.BlockSpec((C, Cr), lambda n: (0, 0)),
                pl.BlockSpec((C, 1), lambda n: (0, 0)),
            ],
            out_specs=pl.BlockSpec((1, C, S), lambda n: (n, 0, 0)),
            compiler_params=pltpu.CompilerParams(
                dimension_semantics=("parallel",),
                vmem_limit_bytes=vmem_limit_bytes),
        )(xf, w1c, b1c, w2c, b2c)
        return yf.reshape(N, C, D, H, W)

    # ---------- streaming two-pass path ----------
    TS = _choose_ts(S, C, itemsize, block_spatial_bytes, min_lanes)
    n_chunks = -(-S // TS)
    rem = S - (n_chunks - 1) * TS
    if rem == TS:
        rem = 0                          # no ragged tail
    # Split the spatial reduction over 2 "parallel" outers so both TensorCores
    # of a v7x chip have work even when N is small; harmless on v5e/v6e.
    n_outer = 2 if (n_chunks >= 2 and n_chunks % 2 == 0) else 1
    n_inner = n_chunks // n_outer
    # TODO(synk): odd n_chunks keeps n_outer=1 (pass 1 then uses one TC on v7x).

    def _x_idx(n, o, i):
        return (n, 0, o * n_inner + i)

    psum = pl.pallas_call(
        partial(_pool_kernel, n_inner=n_inner, n_chunks=n_chunks,
                rem=rem, c=C, ts=TS),
        out_shape=jax.ShapeDtypeStruct((N, n_outer, C, 1), jnp.float32),
        grid=(N, n_outer, n_inner),
        in_specs=[pl.BlockSpec((1, C, TS), _x_idx)],
        out_specs=pl.BlockSpec((1, 1, C, 1), lambda n, o, i: (n, o, 0, 0)),
        scratch_shapes=[pltpu.VMEM((1, C, 1), jnp.float32)],
        compiler_params=pltpu.CompilerParams(
            dimension_semantics=("parallel", "parallel", "arbitrary"),
            vmem_limit_bytes=vmem_limit_bytes),
    )(xf)

    # Tiny batched gate chain in plain JAX: (N,C) x (C,Cr) x (Cr,C), MXU-sane,
    # and emits the gate directly in the (N, C, 1) layout pass 2 wants.
    mean = jnp.sum(psum[:, :, :, 0], axis=1) * inv_s                     # (N, C)
    h = jnp.dot(mean, jnp.asarray(w1, jnp.float32).T,
                precision=jax.lax.Precision.HIGHEST) + jnp.asarray(b1, jnp.float32)
    h = jnp.maximum(h, 0.0)
    g = jnp.dot(h, jnp.asarray(w2, jnp.float32).T,
                precision=jax.lax.Precision.HIGHEST) + jnp.asarray(b2, jnp.float32)
    gate = (1.0 / (1.0 + jnp.exp(-g))).astype(x.dtype)[:, :, None]       # (N, C, 1)

    yf = pl.pallas_call(
        _scale_kernel,
        out_shape=jax.ShapeDtypeStruct((N, C, S), x.dtype),
        grid=(N, n_chunks),
        in_specs=[
            pl.BlockSpec((1, C, TS), lambda n, s: (n, 0, s)),
            pl.BlockSpec((1, C, 1), lambda n, s: (n, 0, 0)),
        ],
        out_specs=pl.BlockSpec((1, C, TS), lambda n, s: (n, 0, s)),
        compiler_params=pltpu.CompilerParams(
            dimension_semantics=("parallel", "parallel"),
            vmem_limit_bytes=vmem_limit_bytes),
    )(xf, gate)
    return yf.reshape(N, C, D, H, W)


def se_module_ref(x, w1, b1, w2, b2):
    """Pure-JAX reference reproducing the PyTorch SEModule forward."""
    N, C = x.shape[0], x.shape[1]
    mean = x.reshape(N, C, -1).astype(jnp.float32).mean(axis=-1)          # (N, C)
    h = jnp.dot(mean, jnp.asarray(w1, jnp.float32).T,
                precision=jax.lax.Precision.HIGHEST) + jnp.asarray(b1, jnp.float32)
    h = jnp.maximum(h, 0.0)
    g = jnp.dot(h, jnp.asarray(w2, jnp.float32).T,
                precision=jax.lax.Precision.HIGHEST) + jnp.asarray(b2, jnp.float32)
    g = 1.0 / (1.0 + jnp.exp(-g))
    return x * g.astype(x.dtype)[:, :, None, None, None]


if __name__ == "__main__":
    key = jax.random.PRNGKey(0)
    kx, k1, k2, k3, k4 = jax.random.split(key, 5)

    # ---- Config 1: fused fast path (slab fits in VMEM). ----
    N, C, Cr, D, H, W = 2, 32, 8, 4, 8, 8
    x = jax.random.normal(kx, (N, C, D, H, W), dtype=jnp.float32)
    w1 = jax.random.normal(k1, (Cr, C), dtype=jnp.float32) * 0.1   # fc1 (Conv3d 1x1x1)
    b1 = jax.random.normal(k2, (Cr,), dtype=jnp.float32) * 0.1
    w2 = jax.random.normal(k3, (C, Cr), dtype=jnp.float32) * 0.1   # fc2 (Conv3d 1x1x1)
    b2 = jax.random.normal(k4, (C,), dtype=jnp.float32) * 0.1

    ref = jax.block_until_ready(se_module_ref(x, w1, b1, w2, b2))

    out_fused = jax.block_until_ready(se_module(x, w1, b1, w2, b2))
    assert out_fused.shape == x.shape, out_fused.shape
    np.testing.assert_allclose(np.asarray(out_fused), np.asarray(ref),
                               rtol=1e-5, atol=1e-5)

    # ---- Config 2: force the two-pass streaming path (aligned, single chunk). ----
    out_2p = jax.block_until_ready(se_module(x, w1, b1, w2, b2, fast_path_bytes=0))
    np.testing.assert_allclose(np.asarray(out_2p), np.asarray(ref),
                               rtol=1e-5, atol=1e-5)

    # ---- Config 3: two-pass path with ragged tail chunk + 2-way spatial split. ----
    C2, Cr2, D2, H2, W2 = 16, 4, 3, 7, 11          # S = 231, not a multiple of 128
    x2 = jax.random.normal(kx, (N, C2, D2, H2, W2), dtype=jnp.float32)
    w1b = jax.random.normal(k1, (Cr2, C2), dtype=jnp.float32) * 0.1
    b1b = jax.random.normal(k2, (Cr2,), dtype=jnp.float32) * 0.1
    w2b = jax.random.normal(k3, (C2, Cr2), dtype=jnp.float32) * 0.1
    b2b = jax.random.normal(k4, (C2,), dtype=jnp.float32) * 0.1

    ref2 = jax.block_until_ready(se_module_ref(x2, w1b, b1b, w2b, b2b))
    out2 = jax.block_until_ready(
        se_module(x2, w1b, b1b, w2b, b2b,
                  fast_path_bytes=0, block_spatial_bytes=1 << 12, min_lanes=128))
    np.testing.assert_allclose(np.asarray(out2), np.asarray(ref2),
                               rtol=1e-5, atol=1e-5)

    print("KERNEL_OK")
</pallas_src>

<mosaic_0001>
module attributes {stable_mosaic.version = 11 : i64} {
  func.func @_se_fused_kernel(%arg0: i32, %arg1: memref<1x32x256xf32, #tpu.memory_space<vmem>>, %arg2: memref<8x32xf32, #tpu.memory_space<vmem>>, %arg3: memref<8x1xf32, #tpu.memory_space<vmem>>, %arg4: memref<32x8xf32, #tpu.memory_space<vmem>>, %arg5: memref<32x1xf32, #tpu.memory_space<vmem>>, %arg6: memref<1x32x256xf32, #tpu.memory_space<vmem>>) attributes {dimension_semantics = [#tpu.dimension_semantics<parallel>], iteration_bounds = array<i64: 2>, scalar_prefetch = 0 : i64, scratch_operands = 0 : i64, tpu.core_type = #tpu.core_type<tc>, window_params = [{transform_indices = @transform_0, window_bounds = array<i64: 1, 32, 256>}, {pipeline_mode = #tpu.pipeline_mode<synchronous>, transform_indices = @transform_1, window_bounds = array<i64: 8, 32>}, {pipeline_mode = #tpu.pipeline_mode<synchronous>, transform_indices = @transform_2, window_bounds = array<i64: 8, 1>}, {pipeline_mode = #tpu.pipeline_mode<synchronous>, transform_indices = @transform_3, window_bounds = array<i64: 32, 8>}, {pipeline_mode = #tpu.pipeline_mode<synchronous>, transform_indices = @transform_4, window_bounds = array<i64: 32, 1>}, {transform_indices = @transform_5, window_bounds = array<i64: 1, 32, 256>}]} {
    %c0 = arith.constant 0 : index
    %c0_0 = arith.constant 0 : index
    %c0_1 = arith.constant 0 : index
    %0 = vector.load %arg1[%c0, %c0_0, %c0_1] : memref<1x32x256xf32, #tpu.memory_space<vmem>>, vector<1x32x256xf32>
    %cst = arith.constant dense<0.000000e+00> : vector<1x32xf32>
    %1 = vector.multi_reduction <add>, %0, %cst [2] : vector<1x32x256xf32> to vector<1x32xf32>
    %2 = vector.shape_cast %1 : vector<1x32xf32> to vector<1x32x1xf32>
    %3 = vector.shape_cast %2 : vector<1x32x1xf32> to vector<32x1xf32>
    %cst_2 = arith.constant 3.906250e-03 : f32
    %4 = vector.broadcast %cst_2 : f32 to vector<32x1xf32>
    %5 = arith.mulf %3, %4 : vector<32x1xf32>
    %c0_3 = arith.constant 0 : index
    %c0_4 = arith.constant 0 : index
    %6 = vector.load %arg2[%c0_3, %c0_4] : memref<8x32xf32, #tpu.memory_space<vmem>>, vector<8x32xf32>
    %cst_5 = arith.constant dense<0.000000e+00> : vector<8x1xf32>
    %7 = tpu.matmul %6, %5, %cst_5 {dimension_numbers = #tpu.dot_dimension_numbers<[1], [0], [0], [1], [0, 0, 1, 1], [], []>, precision = #tpu.contract_precision<fp32>} : vector<8x32xf32>, vector<32x1xf32>, vector<8x1xf32> -> vector<8x1xf32>
    %c0_6 = arith.constant 0 : index
    %c0_7 = arith.constant 0 : index
    %8 = vector.load %arg3[%c0_6, %c0_7] : memref<8x1xf32, #tpu.memory_space<vmem>>, vector<8x1xf32>
    %9 = arith.addf %7, %8 : vector<8x1xf32>
    %cst_8 = arith.constant 0.000000e+00 : f32
    %10 = vector.broadcast %cst_8 : f32 to vector<8x1xf32>
    %11 = arith.maximumf %9, %10 : vector<8x1xf32>
    %c0_9 = arith.constant 0 : index
    %c0_10 = arith.constant 0 : index
    %12 = vector.load %arg4[%c0_9, %c0_10] : memref<32x8xf32, #tpu.memory_space<vmem>>, vector<32x8xf32>
    %cst_11 = arith.constant dense<0.000000e+00> : vector<32x1xf32>
    %13 = tpu.matmul %12, %11, %cst_11 {dimension_numbers = #tpu.dot_dimension_numbers<[1], [0], [0], [1], [0, 0, 1, 1], [], []>, precision = #tpu.contract_precision<fp32>} : vector<32x8xf32>, vector<8x1xf32>, vector<32x1xf32> -> vector<32x1xf32>
    %c0_12 = arith.constant 0 : index
    %c0_13 = arith.constant 0 : index
    %14 = vector.load %arg5[%c0_12, %c0_13] : memref<32x1xf32, #tpu.memory_space<vmem>>, vector<32x1xf32>
    %15 = arith.addf %13, %14 : vector<32x1xf32>
    %cst_14 = arith.constant 0.000000e+00 : f32
    %16 = vector.broadcast %cst_14 : f32 to vector<32x1xf32>
    %17 = arith.subf %16, %15 : vector<32x1xf32>
    %18 = math.exp %17 : vector<32x1xf32>
    %cst_15 = arith.constant 1.000000e+00 : f32
    %19 = vector.broadcast %cst_15 : f32 to vector<32x1xf32>
    %20 = arith.addf %19, %18 : vector<32x1xf32>
    %cst_16 = arith.constant 1.000000e+00 : f32
    %21 = vector.broadcast %cst_16 : f32 to vector<32x1xf32>
    %22 = arith.divf %21, %20 : vector<32x1xf32>
    %c0_17 = arith.constant 0 : index
    %c0_18 = arith.constant 0 : index
    %c0_19 = arith.constant 0 : index
    %23 = vector.load %arg1[%c0_17, %c0_18, %c0_19] : memref<1x32x256xf32, #tpu.memory_space<vmem>>, vector<1x32x256xf32>
    %24 = vector.shape_cast %22 : vector<32x1xf32> to vector<1x32x1xf32>
    %25 = vector.broadcast %24 : vector<1x32x1xf32> to vector<1x32x256xf32>
    %26 = arith.mulf %23, %25 : vector<1x32x256xf32>
    %c0_20 = arith.constant 0 : index
    %c0_21 = arith.constant 0 : index
    %c0_22 = arith.constant 0 : index
    %27 = vector.load %arg6[%c0_20, %c0_21, %c0_22] : memref<1x32x256xf32, #tpu.memory_space<vmem>>, vector<1x32x256xf32>
    tpu.vector_store %arg6[%c0_20, %c0_21, %c0_22], %26 {strides = array<i32>} : memref<1x32x256xf32, #tpu.memory_space<vmem>>, vector<1x32x256xf32>,
    return
  }
  func.func @transform_0(%arg0: i32) -> (i32, i32, i32) {
    %c0_i32 = arith.constant 0 : i32
    %c0_i32_0 = arith.constant 0 : i32
    %c0_i32_1 = arith.constant 0 : i32
    return %arg0, %c0_i32, %c0_i32_0 : i32, i32, i32
  }
  func.func @transform_1(%arg0: i32) -> (i32, i32) {
    %c0_i32 = arith.constant 0 : i32
    %c0_i32_0 = arith.constant 0 : i32
    %c0_i32_1 = arith.constant 0 : i32
    return %c0_i32, %c0_i32_0 : i32, i32
  }
  func.func @transform_2(%arg0: i32) -> (i32, i32) {
    %c0_i32 = arith.constant 0 : i32
    %c0_i32_0 = arith.constant 0 : i32
    %c0_i32_1 = arith.constant 0 : i32
    return %c0_i32, %c0_i32_0 : i32, i32
  }
  func.func @transform_3(%arg0: i32) -> (i32, i32) {
    %c0_i32 = arith.constant 0 : i32
    %c0_i32_0 = arith.constant 0 : i32
    %c0_i32_1 = arith.constant 0 : i32
    return %c0_i32, %c0_i32_0 : i32, i32
  }
  func.func @transform_4(%arg0: i32) -> (i32, i32) {
    %c0_i32 = arith.constant 0 : i32
    %c0_i32_0 = arith.constant 0 : i32
    %c0_i32_1 = arith.constant 0 : i32
    return %c0_i32, %c0_i32_0 : i32, i32
  }
  func.func @transform_5(%arg0: i32) -> (i32, i32, i32) {
    %c0_i32 = arith.constant 0 : i32
    %c0_i32_0 = arith.constant 0 : i32
    %c0_i32_1 = arith.constant 0 : i32
    return %arg0, %c0_i32, %c0_i32_0 : i32, i32, i32
  }
}

</mosaic_0001>

<llo_original>
// kernel: tpu_custom_call.1
$region0: #{tpu_custom_call.1}
  #allocation0 [shape = 'u32[]', space=smem, size = 0x4, offset = 0x4, fixed_abs, tag = 'smem constant byte address 0x4 - core index']
  #allocation1 [shape = 'u32[72,128]{1,0:T(1,128)}', space=vmem, size = 0x9000, scoped, tag = 'internal scratch']
  %s0 = inlined_call_operand.hbm [shape: f32[2,32,256], index: 0, kind: input, shape index: {}]
  %s1 = inlined_call_operand.vmem [shape: f32[8,32], index: 1, kind: input, shape index: {}]
  %s2 = inlined_call_operand.vmem [shape: f32[8,1], index: 2, kind: input, shape index: {}]
  %s3 = inlined_call_operand.vmem [shape: f32[32,8], index: 3, kind: input, shape index: {}]
  %s4 = inlined_call_operand.vmem [shape: f32[32,1], index: 4, kind: input, shape index: {}]
  %s5 = inlined_call_operand.hbm [shape: f32[2,32,256], index: 5, kind: output, shape index: {}]
  %s6 = sld [smem:[#allocation0]]
  $region57: #{tpu_custom_call.1} parent=0
    _
  %s8 = ssub.s32 1, %s6
  %s9 = scalar_select 0, %s8, %s6
  $region1: #{tpu_custom_call.1} parent=0
    #allocation2 [shape = 'u8[65536]{0}', space=vmem, size = 0x10000, scoped, tag = 'input window, operand 0']
    #allocation3 [shape = 's32[2]{0}', space=sflag, size = 0x8, scoped, tag = 'scoped memory for tpu_custom_call.1']
    #allocation4 [shape = 's32[2]{0}', space=sflag, size = 0x8, scoped, tag = 'scoped memory for tpu_custom_call.1']
    #allocation5 [shape = 'u8[65536]{0}', space=vmem, size = 0x10000, scoped, tag = 'output window, operand 0']
    %10 = vsyncpa [#allocation3], 0
    %s11 = scalar_lea.sflag [#allocation3], 1
    %12 = vsyncpa %s11, 0
    %13 = vsyncpa [#allocation4], 0
    %s14 = scalar_lea.sflag [#allocation4], 1
    %15 = vsyncpa %s14, 0
    loop: start=0, step=1, limit=4
    $region2: #{tpu_custom_call.1} parent=1 // loop_pre_header
      _
    $region3: #{tpu_custom_call.1} parent=1 // loop_header
      %s17 = sphi 0, %s21
      %p18 = scmp.ge.s32.totalorder %s17, 4
      %s27 = sphi 0, %s29
      %s30 = sphi 0, %s27
      %s31 = sphi 0, %s30
      %s47 = sphi 0, %s31
      %s51 = sphi 0, %s51
      %s53 = sphi 0, %s51
      %s54 = sphi 0, %s53
      %s68 = sphi 0, %s54
      %s72 = sphi 0, %s72
      %s74 = sphi 0, %s72
      %s75 = sphi 0, %s74
      %s89 = sphi 0, %s75
      %s93 = sphi 0, %s93
      %s95 = sphi 0, %s93
      %s96 = sphi 0, %s95
      %s110 = sphi 0, %s96
      %s114 = sphi 0, %s114
      %s116 = sphi 0, %s114
      %s117 = sphi 0, %s116
      %s131 = sphi 0, %s117
      %s137 = sphi 0, %s139
      %s140 = sphi 0, %s137
      %s141 = sphi 0, %s140
      %s157 = sphi 0, %s141
    $region4: #{tpu_custom_call.1} parent=1 // loop_header_branch
      %20 = sbr.rel (%p18) target = $region8
    $region5: #{tpu_custom_call.1} parent=1 // loop_body
      %s22 = ssub.s32 %s17, 1
      %s23 = ssub.s32 %s17, 2
      %s24 = sadd.s32 %s17, 1
      %s25 = ssub.s32 %s17, %s24
      %p26 = scmp.eq.s32.totalorder %s25, 0
      %s28 = sadd.s32 %s27, 1
      %s29 = scalar_select %p26, %s27, %s28
      %p32 = pneg %p26
      %p33 = scmp.eq.s32.totalorder %s17, 1
      %p34 = por %p32, %p33
      %p35 = scmp.ne.s32.totalorder %s27, %s30
      %p36 = scmp.eq.s32.totalorder %s17, 0
      %p37 = por %p35, %p36
      %p38 = scmp.ne.s32.totalorder %s27, %s30
      %p39 = scmp.eq.s32.totalorder %s22, 1
      %p40 = por %p38, %p39
      %p41 = scmp.ne.s32.totalorder %s30, %s31
      %p42 = scmp.eq.s32.totalorder %s22, 0
      %p43 = por %p41, %p42
      %p44 = scmp.ne.s32.totalorder %s30, %s31
      %p45 = scmp.eq.s32.totalorder %s23, 1
      %p46 = por %p44, %p45
      %p48 = scmp.ne.s32.totalorder %s31, %s47
      %p49 = scmp.eq.s32.totalorder %s23, 0
      %p50 = por %p48, %p49
      %s52 = sadd.s32 %s51, 1
      %p55 = scmp.eq.s32.totalorder %s17, 1
      %p56 = scmp.ne.s32.totalorder %s51, %s53
      %p57 = scmp.eq.s32.totalorder %s17, 0
      %p58 = por %p56, %p57
      %p59 = scmp.ne.s32.totalorder %s51, %s53
      %p60 = scmp.eq.s32.totalorder %s22, 1
      %p61 = por %p59, %p60
      %p62 = scmp.ne.s32.totalorder %s53, %s54
      %p63 = scmp.eq.s32.totalorder %s22, 0
      %p64 = por %p62, %p63
      %p65 = scmp.ne.s32.totalorder %s53, %s54
      %p66 = scmp.eq.s32.totalorder %s23, 1
      %p67 = por %p65, %p66
      %p69 = scmp.ne.s32.totalorder %s54, %s68
      %p70 = scmp.eq.s32.totalorder %s23, 0
      %p71 = por %p69, %p70
      %s73 = sadd.s32 %s72, 1
      %p76 = scmp.eq.s32.totalorder %s17, 1
      %p77 = scmp.ne.s32.totalorder %s72, %s74
      %p78 = scmp.eq.s32.totalorder %s17, 0
      %p79 = por %p77, %p78
      %p80 = scmp.ne.s32.totalorder %s72, %s74
      %p81 = scmp.eq.s32.totalorder %s22, 1
      %p82 = por %p80, %p81
      %p83 = scmp.ne.s32.totalorder %s74, %s75
      %p84 = scmp.eq.s32.totalorder %s22, 0
      %p85 = por %p83, %p84
      %p86 = scmp.ne.s32.totalorder %s74, %s75
      %p87 = scmp.eq.s32.totalorder %s23, 1
      %p88 = por %p86, %p87
      %p90 = scmp.ne.s32.totalorder %s75, %s89
      %p91 = scmp.eq.s32.totalorder %s23, 0
      %p92 = por %p90, %p91
      %s94 = sadd.s32 %s93, 1
      %p97 = scmp.eq.s32.totalorder %s17, 1
      %p98 = scmp.ne.s32.totalorder %s93, %s95
      %p99 = scmp.eq.s32.totalorder %s17, 0
      %p100 = por %p98, %p99
      %p101 = scmp.ne.s32.totalorder %s93, %s95
      %p102 = scmp.eq.s32.totalorder %s22, 1
      %p103 = por %p101, %p102
      %p104 = scmp.ne.s32.totalorder %s95, %s96
      %p105 = scmp.eq.s32.totalorder %s22, 0
      %p106 = por %p104, %p105
      %p107 = scmp.ne.s32.totalorder %s95, %s96
      %p108 = scmp.eq.s32.totalorder %s23, 1
      %p109 = por %p107, %p108
      %p111 = scmp.ne.s32.totalorder %s96, %s110
      %p112 = scmp.eq.s32.totalorder %s23, 0
      %p113 = por %p111, %p112
      %s115 = sadd.s32 %s114, 1
      %p118 = scmp.eq.s32.totalorder %s17, 1
      %p119 = scmp.ne.s32.totalorder %s114, %s116
      %p120 = scmp.eq.s32.totalorder %s17, 0
      %p121 = por %p119, %p120
      %p122 = scmp.ne.s32.totalorder %s114, %s116
      %p123 = scmp.eq.s32.totalorder %s22, 1
      %p124 = por %p122, %p123
      %p125 = scmp.ne.s32.totalorder %s116, %s117
      %p126 = scmp.eq.s32.totalorder %s22, 0
      %p127 = por %p125, %p126
      %p128 = scmp.ne.s32.totalorder %s116, %s117
      %p129 = scmp.eq.s32.totalorder %s23, 1
      %p130 = por %p128, %p129
      %p132 = scmp.ne.s32.totalorder %s117, %s131
      %p133 = scmp.eq.s32.totalorder %s23, 0
      %p134 = por %p132, %p133
      %s135 = ssub.s32 %s17, %s24
      %p136 = scmp.eq.s32.totalorder %s135, 0
      %s138 = sadd.s32 %s137, 1
      %s139 = scalar_select %p136, %s137, %s138
      %p142 = pneg %p136
      %p143 = scmp.eq.s32.totalorder %s17, 1
      %p144 = por %p142, %p143
      %p145 = scmp.ne.s32.totalorder %s137, %s140
      %p146 = scmp.eq.s32.totalorder %s17, 0
      %p147 = por %p145, %p146
      %p148 = scmp.ne.s32.totalorder %s137, %s140
      %p149 = scmp.eq.s32.totalorder %s22, 1
      %p150 = por %p148, %p149
      %p151 = scmp.ne.s32.totalorder %s140, %s141
      %p152 = scmp.eq.s32.totalorder %s22, 0
      %p153 = por %p151, %p152
      %p154 = scmp.ne.s32.totalorder %s140, %s141
      %p155 = scmp.eq.s32.totalorder %s23, 1
      %p156 = por %p154, %p155
      %p158 = scmp.ne.s32.totalorder %s141, %s157
      %p159 = scmp.eq.s32.totalorder %s23, 0
      %p160 = por %p158, %p159
      %p161 = scmp.le.s32.totalorder 1, %s17
      %p162 = scmp.lt.s32.totalorder %s17, 3
      %p163 = pnand %p161, %p162
      %p164 = pneg %p163
      // Predicated region
      $region9: #{tpu_custom_call.1} parent=5 // pred_check
        _
      $region10: #{tpu_custom_call.1} parent=5 // pred_check_branch
        %166 = sbr.rel (%p163) target = $region12
      $region11: #{tpu_custom_call.1} parent=5 // pred_region
        %s167 = ssub.s32 %s17, 1
        // Predicated region
        $region13: #{tpu_custom_call.1} parent=11 // pred_check
          %p168 = pneg %p64
        $region14: #{tpu_custom_call.1} parent=11 // pred_check_branch
          %170 = sbr.rel (%p168) target = $region16
        $region15: #{tpu_custom_call.1} parent=11 // pred_region
          _
        $region16: #{tpu_custom_call.1} parent=11 // pred_fallthru
          _
        // Predicated region
        $region17: #{tpu_custom_call.1} parent=11 // pred_check
          %p171 = pneg %p85
        $region18: #{tpu_custom_call.1} parent=11 // pred_check_branch
          %173 = sbr.rel (%p171) target = $region20
        $region19: #{tpu_custom_call.1} parent=11 // pred_region
          _
        $region20: #{tpu_custom_call.1} parent=11 // pred_fallthru
          _
        // Predicated region
        $region21: #{tpu_custom_call.1} parent=11 // pred_check
          %p174 = pneg %p106
        $region22: #{tpu_custom_call.1} parent=11 // pred_check_branch
          %176 = sbr.rel (%p174) target = $region24
        $region23: #{tpu_custom_call.1} parent=11 // pred_region
          _
        $region24: #{tpu_custom_call.1} parent=11 // pred_fallthru
          _
        // Predicated region
        $region25: #{tpu_custom_call.1} parent=11 // pred_check
          %p177 = pneg %p127
        $region26: #{tpu_custom_call.1} parent=11 // pred_check_branch
          %179 = sbr.rel (%p177) target = $region28
        $region27: #{tpu_custom_call.1} parent=11 // pred_region
          _
        $region28: #{tpu_custom_call.1} parent=11 // pred_fallthru
          _
      $region12: #{tpu_custom_call.1} parent=5 // pred_fallthru
        _
      %p180 = scmp.lt.s32.totalorder %s17, 2
      // Predicated region
      $region29: #{tpu_custom_call.1} parent=5 // pred_check
        %p181 = pneg %p180
      $region30: #{tpu_custom_call.1} parent=5 // pred_check_branch
        %183 = sbr.rel (%p181) target = $region32
      $region31: #{tpu_custom_call.1} parent=5 // pred_region
        // Predicated region
        $region33: #{tpu_custom_call.1} parent=31 // pred_check
          %p184 = pneg %p37
        $region34: #{tpu_custom_call.1} parent=31 // pred_check_branch
          %186 = sbr.rel (%p184) target = $region36
        $region35: #{tpu_custom_call.1} parent=31 // pred_region
          %s187 = sand.u32 %s27, 1
          %s188 = scalar_lea.sflag [#allocation3], %s187
          %s189 = sand.u32 %s27, 1
          %s190 = smul.addr %s189, 64
          %s191 = scalar_lea.vmem [#allocation2], %s190
          %193 = vsyncadd %s188, 0
          %s194 = smul.addr %s17, 8
          %s195 = smul.addr %s194, 8
          %s196 = scalar_lea.hbm %s0, %s195
          %s197 = sshll.u32 %s196, 4
          %s198 = int_to_ptr.hbm [resolvable:$true] %s197
          %s199 = sshll.u32 %s191, 4
          %s200 = int_to_ptr.vmem [resolvable:$true] %s199
          %205 = dma.hbm_to_vmem [thread:$0]  %s198, 1024, %s200, %s188, 256, 256, 16
        $region36: #{tpu_custom_call.1} parent=31 // pred_fallthru
          _
      $region32: #{tpu_custom_call.1} parent=5 // pred_fallthru
        _
      %p206 = scmp.le.s32.totalorder 1, %s17
      %p207 = scmp.lt.s32.totalorder %s17, 3
      %p208 = pnand %p206, %p207
      %p209 = pneg %p208
      // Predicated region
      $region37: #{tpu_custom_call.1} parent=5 // pred_check
        _
      $region38: #{tpu_custom_call.1} parent=5 // pred_check_branch
        %211 = sbr.rel (%p208) target = $region40
      $region39: #{tpu_custom_call.1} parent=5 // pred_region
        %s212 = ssub.s32 %s17, 1
        %s213 = sand.u32 %s30, 1
        %s214 = scalar_lea.sflag [#allocation3], %s213
        %s215 = sand.u32 %s30, 1
        %s216 = smul.addr %s215, 64
        %s217 = scalar_lea.vmem [#allocation2], %s216
        // Predicated region
        $region41: #{tpu_custom_call.1} parent=39 // pred_check
          %p218 = pneg %p43
        $region42: #{tpu_custom_call.1} parent=39 // pred_check_branch
          %220 = sbr.rel (%p218) target = $region44
        $region43: #{tpu_custom_call.1} parent=39 // pred_region
          %222 = dma.done %s214, 1024
        $region44: #{tpu_custom_call.1} parent=39 // pred_fallthru
          _
        %s223 = sand.u32 %s30, 1
        %s224 = scalar_lea.sflag [#allocation3], %s223
        %s225 = sand.u32 %s30, 1
        %s226 = smul.addr %s225, 64
        %s227 = scalar_lea.vmem [#allocation2], %s226
        %p228 = pneg %p43
        %p229 = pneg %p40
        %p230 = pneg %p64
        %p231 = pneg %p61
        %p232 = pneg %p85
        %p233 = pneg %p82
        %p234 = pneg %p106
        %p235 = pneg %p103
        %p236 = pneg %p127
        %p237 = pneg %p124
        %p238 = pneg %p153
        %p239 = pneg %p150
        %s240 = sand.u32 %s140, 1
        %s241 = scalar_lea.sflag [#allocation4], %s240
        %s242 = sand.u32 %s140, 1
        %s243 = smul.addr %s242, 64
        %s244 = scalar_lea.vmem [#allocation5], %s243
        %v245 = vld [vmem:[%s217] sm:$0xff]
        %v246 = vld [vmem:[%s217 + $0x8] sm:$0xff]
        %v247 = vld [vmem:[%s217 + $0x10] sm:$0xff]
        %v248 = vld [vmem:[%s217 + $0x18] sm:$0xff]
        %v249 = vld [vmem:[%s217 + $0x20] sm:$0xff]
        %v250 = vld [vmem:[%s217 + $0x28] sm:$0xff]
        %v251 = vld [vmem:[%s217 + $0x30] sm:$0xff]
        %v252 = vld [vmem:[%s217 + $0x38] sm:$0xff]
        %v253 = vadd.f32 %v245, %v246
        %254 = vadd.xlane.f32.xlu0 %v253
        %v255 = vpop.xlane.xlu0 %254
        %v256 = vadd.f32 %v247, %v248
        %257 = vadd.xlane.f32.xlu0 %v256
        %v258 = vpop.xlane.xlu0 %257
        %v259 = vadd.f32 %v249, %v250
        %260 = vadd.xlane.f32.xlu0 %v259
        %v261 = vpop.xlane.xlu0 %260
        %v262 = vadd.f32 %v251, %v252
        %263 = vadd.xlane.f32.xlu0 %v262
        %v264 = vpop.xlane.xlu0 %263
        %v265 = vmul.f32 %v255, 0.00390625
        %v266 = vmul.f32 %v258, 0.00390625
        %v267 = vmul.f32 %v261, 0.00390625
        %v268 = vmul.f32 %v264, 0.00390625
        %v269 = vld [vmem:[%s1] sm:$0xff]
        %v270 = vld [vmem:[%s2] sm:$0xff]
        %vm271 = vcmask 261120
        %v273 = vsel %vm271, %v269, 0
        %275 = vmatpush.msra.mxu0 0.0
        %276 = vmatpush.msra.mxu0 0.0
        %277 = vmatpush.msra.mxu0 0.0
        %278 = vmatpush.msra.mxu0 0.0
        %279 = vmatpush.msra.mxu0 0.0
        %280 = vmatpush.msra.mxu0 0.0
        %281 = vmatpush.msra.mxu0 0.0
        %282 = vmatpush.msra.mxu0 0.0
        %283 = vmatpush.msra.mxu0 0.0
        %284 = vmatpush.msra.mxu0 0.0
        %285 = vmatpush.msra.mxu0 0.0
        %286 = vmatpush.msra.mxu0 0.0
        %v287 = vand.u32 %v268, 4294901760
        %288 = vmatpush.msra.mxu0 %v287
        %v289 = vand.u32 %v267, 4294901760
        %290 = vmatpush.msra.mxu0 %v289
        %v291 = vand.u32 %v266, 4294901760
        %292 = vmatpush.msra.mxu0 %v291
        %v293 = vand.u32 %v265, 4294901760
        %294 = vmatpush.msra.mxu0 %v293
        %v295 = vand.u32 %v273, 4294901760
        %v296 = vsub.f32 %v273, %v295
        %v297 = vand.u32 %v296, 4294901760
        %v298 = vsub.f32 %v296, %v297
        %v299 = vand.u32 %v298, 4294901760
        %300 = vmatmul.f32.gmra.mxu0 %v299
        %v301 = vpop.f32.mrf.mxu0
        %v302 = vadd.f32 %v270, %v301
        %303 = vdwg.mxu0
        %304 = vmatpush.msra.mxu0 0.0
        %305 = vmatpush.msra.mxu0 0.0
        %306 = vmatpush.msra.mxu0 0.0
        %307 = vmatpush.msra.mxu0 0.0
        %308 = vmatpush.msra.mxu0 0.0
        %309 = vmatpush.msra.mxu0 0.0
        %310 = vmatpush.msra.mxu0 0.0
        %311 = vmatpush.msra.mxu0 0.0
        %312 = vmatpush.msra.mxu0 0.0
        %313 = vmatpush.msra.mxu0 0.0
        %314 = vmatpush.msra.mxu0 0.0
        %315 = vmatpush.msra.mxu0 0.0
        %v316 = vand.u32 %v268, 4294901760
        %v317 = vsub.f32 %v268, %v316
        %v318 = vand.u32 %v317, 4294901760
        %v319 = vsub.f32 %v317, %v318
        %v320 = vand.u32 %v319, 4294901760
        %321 = vmatpush.msra.mxu0 %v320
        %v322 = vand.u32 %v267, 4294901760
        %v323 = vsub.f32 %v267, %v322
        %v324 = vand.u32 %v323, 4294901760
        %v325 = vsub.f32 %v323, %v324
        %v326 = vand.u32 %v325, 4294901760
        %327 = vmatpush.msra.mxu0 %v326
        %v328 = vand.u32 %v266, 4294901760
        %v329 = vsub.f32 %v266, %v328
        %v330 = vand.u32 %v329, 4294901760
        %v331 = vsub.f32 %v329, %v330
        %v332 = vand.u32 %v331, 4294901760
        %333 = vmatpush.msra.mxu0 %v332
        %v334 = vand.u32 %v265, 4294901760
        %v335 = vsub.f32 %v265, %v334
        %v336 = vand.u32 %v335, 4294901760
        %v337 = vsub.f32 %v335, %v336
        %v338 = vand.u32 %v337, 4294901760
        %339 = vmatpush.msra.mxu0 %v338
        %v340 = vand.u32 %v273, 4294901760
        %341 = vmatmul.f32.gmra.mxu0 %v340
        %v342 = vpop.f32.mrf.mxu0
        %v343 = vadd.f32 %v302, %v342
        %344 = vdwg.mxu0
        %345 = vmatpush.msra.mxu0 0.0
        %346 = vmatpush.msra.mxu0 0.0
        %347 = vmatpush.msra.mxu0 0.0
        %348 = vmatpush.msra.mxu0 0.0
        %349 = vmatpush.msra.mxu0 0.0
        %350 = vmatpush.msra.mxu0 0.0
        %351 = vmatpush.msra.mxu0 0.0
        %352 = vmatpush.msra.mxu0 0.0
        %353 = vmatpush.msra.mxu0 0.0
        %354 = vmatpush.msra.mxu0 0.0
        %355 = vmatpush.msra.mxu0 0.0
        %356 = vmatpush.msra.mxu0 0.0
        %v357 = vand.u32 %v268, 4294901760
        %v358 = vsub.f32 %v268, %v357
        %359 = vmatpush.msra.mxu0 %v358
        %v360 = vand.u32 %v267, 4294901760
        %v361 = vsub.f32 %v267, %v360
        %362 = vmatpush.msra.mxu0 %v361
        %v363 = vand.u32 %v266, 4294901760
        %v364 = vsub.f32 %v266, %v363
        %365 = vmatpush.msra.mxu0 %v364
        %v366 = vand.u32 %v265, 4294901760
        %v367 = vsub.f32 %v265, %v366
        %368 = vmatpush.msra.mxu0 %v367
        %v369 = vand.u32 %v273, 4294901760
        %v370 = vsub.f32 %v273, %v369
        %371 = vmatmul.f32.gmra.mxu0 %v370
        %v372 = vpop.f32.mrf.mxu0
        %v373 = vadd.f32 %v343, %v372
        %374 = vdwg.mxu0
        %375 = vmatpush.msra.mxu0 0.0
        %376 = vmatpush.msra.mxu0 0.0
        %377 = vmatpush.msra.mxu0 0.0
        %378 = vmatpush.msra.mxu0 0.0
        %379 = vmatpush.msra.mxu0 0.0
        %380 = vmatpush.msra.mxu0 0.0
        %381 = vmatpush.msra.mxu0 0.0
        %382 = vmatpush.msra.mxu0 0.0
        %383 = vmatpush.msra.mxu0 0.0
        %384 = vmatpush.msra.mxu0 0.0
        %385 = vmatpush.msra.mxu0 0.0
        %386 = vmatpush.msra.mxu0 0.0
        %v387 = vand.u32 %v268, 4294901760
        %388 = vmatpush.msra.mxu0 %v387
        %v389 = vand.u32 %v267, 4294901760
        %390 = vmatpush.msra.mxu0 %v389
        %v391 = vand.u32 %v266, 4294901760
        %392 = vmatpush.msra.mxu0 %v391
        %v393 = vand.u32 %v265, 4294901760
        %394 = vmatpush.msra.mxu0 %v393
        %v395 = vand.u32 %v273, 4294901760
        %v396 = vsub.f32 %v273, %v395
        %v397 = vand.u32 %v396, 4294901760
        %398 = vmatmul.f32.gmra.mxu0 %v397
        %v399 = vpop.f32.mrf.mxu0
        %v400 = vadd.f32 %v373, %v399
        %401 = vdwg.mxu0
        %402 = vmatpush.msra.mxu0 0.0
        %403 = vmatpush.msra.mxu0 0.0
        %404 = vmatpush.msra.mxu0 0.0
        %405 = vmatpush.msra.mxu0 0.0
        %406 = vmatpush.msra.mxu0 0.0
        %407 = vmatpush.msra.mxu0 0.0
        %408 = vmatpush.msra.mxu0 0.0
        %409 = vmatpush.msra.mxu0 0.0
        %410 = vmatpush.msra.mxu0 0.0
        %411 = vmatpush.msra.mxu0 0.0
        %412 = vmatpush.msra.mxu0 0.0
        %413 = vmatpush.msra.mxu0 0.0
        %v414 = vand.u32 %v268, 4294901760
        %v415 = vsub.f32 %v268, %v414
        %v416 = vand.u32 %v415, 4294901760
        %417 = vmatpush.msra.mxu0 %v416
        %v418 = vand.u32 %v267, 4294901760
        %v419 = vsub.f32 %v267, %v418
        %v420 = vand.u32 %v419, 4294901760
        %421 = vmatpush.msra.mxu0 %v420
        %v422 = vand.u32 %v266, 4294901760
        %v423 = vsub.f32 %v266, %v422
        %v424 = vand.u32 %v423, 4294901760
        %425 = vmatpush.msra.mxu0 %v424
        %v426 = vand.u32 %v265, 4294901760
        %v427 = vsub.f32 %v265, %v426
        %v428 = vand.u32 %v427, 4294901760
        %429 = vmatpush.msra.mxu0 %v428
        %v430 = vand.u32 %v273, 4294901760
        %431 = vmatmul.f32.gmra.mxu0 %v430
        %v432 = vpop.f32.mrf.mxu0
        %v433 = vadd.f32 %v400, %v432
        %434 = vdwg.mxu0
        %435 = vmatpush.msra.mxu0 0.0
        %436 = vmatpush.msra.mxu0 0.0
        %437 = vmatpush.msra.mxu0 0.0
        %438 = vmatpush.msra.mxu0 0.0
        %439 = vmatpush.msra.mxu0 0.0
        %440 = vmatpush.msra.mxu0 0.0
        %441 = vmatpush.msra.mxu0 0.0
        %442 = vmatpush.msra.mxu0 0.0
        %443 = vmatpush.msra.mxu0 0.0
        %444 = vmatpush.msra.mxu0 0.0
        %445 = vmatpush.msra.mxu0 0.0
        %446 = vmatpush.msra.mxu0 0.0
        %v447 = vand.u32 %v268, 4294901760
        %448 = vmatpush.msra.mxu0 %v447
        %v449 = vand.u32 %v267, 4294901760
        %450 = vmatpush.msra.mxu0 %v449
        %v451 = vand.u32 %v266, 4294901760
        %452 = vmatpush.msra.mxu0 %v451
        %v453 = vand.u32 %v265, 4294901760
        %454 = vmatpush.msra.mxu0 %v453
        %v455 = vand.u32 %v273, 4294901760
        %456 = vmatmul.f32.gmra.mxu0 %v455
        %v457 = vpop.f32.mrf.mxu0
        %v458 = vadd.f32 %v433, %v457
        %459 = vdwg.mxu0
        %v460 = vmax.f32 %v458, 0.0
        %v461 = vld [vmem:[%s3] sm:$0xff]
        %v462 = vld [vmem:[%s3 + $0x8] sm:$0xff]
        %v463 = vld [vmem:[%s3 + $0x10] sm:$0xff]
        %v464 = vld [vmem:[%s3 + $0x18] sm:$0xff]
        %v465 = vld [vmem:[%s4] sm:$0xff]
        %v466 = vld [vmem:[%s4 + $0x8] sm:$0xff]
        %v467 = vld [vmem:[%s4 + $0x10] sm:$0xff]
        %v468 = vld [vmem:[%s4 + $0x18] sm:$0xff]
        %vm469 = vcmask 64512
        %v471 = vsel %vm469, %v461, 0
        %v474 = vsel %vm469, %v462, 0
        %v477 = vsel %vm469, %v463, 0
        %v480 = vsel %vm469, %v464, 0
        %482 = vmatpush.msra.mxu0 0.0
        %483 = vmatpush.msra.mxu0 0.0
        %484 = vmatpush.msra.mxu0 0.0
        %485 = vmatpush.msra.mxu0 0.0
        %486 = vmatpush.msra.mxu0 0.0
        %487 = vmatpush.msra.mxu0 0.0
        %488 = vmatpush.msra.mxu0 0.0
        %489 = vmatpush.msra.mxu0 0.0
        %490 = vmatpush.msra.mxu0 0.0
        %491 = vmatpush.msra.mxu0 0.0
        %492 = vmatpush.msra.mxu0 0.0
        %493 = vmatpush.msra.mxu0 0.0
        %494 = vmatpush.msra.mxu0 0.0
        %495 = vmatpush.msra.mxu0 0.0
        %496 = vmatpush.msra.mxu0 0.0
        %v497 = vand.u32 %v460, 4294901760
        %498 = vmatpush.msra.mxu0 %v497
        %v499 = vand.u32 %v471, 4294901760
        %v500 = vsub.f32 %v471, %v499
        %v501 = vand.u32 %v500, 4294901760
        %v502 = vsub.f32 %v500, %v501
        %v503 = vand.u32 %v502, 4294901760
        %504 = vmatmul.f32.gmra.mxu0 %v503
        %v505 = vpop.f32.mrf.mxu0
        %v506 = vadd.f32 %v465, %v505
        %v507 = vand.u32 %v474, 4294901760
        %v508 = vsub.f32 %v474, %v507
        %v509 = vand.u32 %v508, 4294901760
        %v510 = vsub.f32 %v508, %v509
        %v511 = vand.u32 %v510, 4294901760
        %512 = vmatmul.f32.gmra.mxu0 %v511
        %v513 = vpop.f32.mrf.mxu0
        %v514 = vadd.f32 %v466, %v513
        %v515 = vand.u32 %v477, 4294901760
        %v516 = vsub.f32 %v477, %v515
        %v517 = vand.u32 %v516, 4294901760
        %v518 = vsub.f32 %v516, %v517
        %v519 = vand.u32 %v518, 4294901760
        %520 = vmatmul.f32.gmra.mxu0 %v519
        %v521 = vpop.f32.mrf.mxu0
        %v522 = vadd.f32 %v467, %v521
        %v523 = vand.u32 %v480, 4294901760
        %v524 = vsub.f32 %v480, %v523
        %v525 = vand.u32 %v524, 4294901760
        %v526 = vsub.f32 %v524, %v525
        %v527 = vand.u32 %v526, 4294901760
        %528 = vmatmul.f32.gmra.mxu0 %v527
        %v529 = vpop.f32.mrf.mxu0
        %v530 = vadd.f32 %v468, %v529
        %531 = vdwg.mxu0
        %532 = vmatpush.msra.mxu0 0.0
        %533 = vmatpush.msra.mxu0 0.0
        %534 = vmatpush.msra.mxu0 0.0
        %535 = vmatpush.msra.mxu0 0.0
        %536 = vmatpush.msra.mxu0 0.0
        %537 = vmatpush.msra.mxu0 0.0
        %538 = vmatpush.msra.mxu0 0.0
        %539 = vmatpush.msra.mxu0 0.0
        %540 = vmatpush.msra.mxu0 0.0
        %541 = vmatpush.msra.mxu0 0.0
        %542 = vmatpush.msra.mxu0 0.0
        %543 = vmatpush.msra.mxu0 0.0
        %544 = vmatpush.msra.mxu0 0.0
        %545 = vmatpush.msra.mxu0 0.0
        %546 = vmatpush.msra.mxu0 0.0
        %v547 = vand.u32 %v460, 4294901760
        %v548 = vsub.f32 %v460, %v547
        %v549 = vand.u32 %v548, 4294901760
        %v550 = vsub.f32 %v548, %v549
        %v551 = vand.u32 %v550, 4294901760
        %552 = vmatpush.msra.mxu0 %v551
        %v553 = vand.u32 %v471, 4294901760
        %554 = vmatmul.f32.gmra.mxu0 %v553
        %v555 = vpop.f32.mrf.mxu0
        %v556 = vadd.f32 %v506, %v555
        %v557 = vand.u32 %v474, 4294901760
        %558 = vmatmul.f32.gmra.mxu0 %v557
        %v559 = vpop.f32.mrf.mxu0
        %v560 = vadd.f32 %v514, %v559
        %v561 = vand.u32 %v477, 4294901760
        %562 = vmatmul.f32.gmra.mxu0 %v561
        %v563 = vpop.f32.mrf.mxu0
        %v564 = vadd.f32 %v522, %v563
        %v565 = vand.u32 %v480, 4294901760
        %566 = vmatmul.f32.gmra.mxu0 %v565
        %v567 = vpop.f32.mrf.mxu0
        %v568 = vadd.f32 %v530, %v567
        %569 = vdwg.mxu0
        %570 = vmatpush.msra.mxu0 0.0
        %571 = vmatpush.msra.mxu0 0.0
        %572 = vmatpush.msra.mxu0 0.0
        %573 = vmatpush.msra.mxu0 0.0
        %574 = vmatpush.msra.mxu0 0.0
        %575 = vmatpush.msra.mxu0 0.0
        %576 = vmatpush.msra.mxu0 0.0
        %577 = vmatpush.msra.mxu0 0.0
        %578 = vmatpush.msra.mxu0 0.0
        %579 = vmatpush.msra.mxu0 0.0
        %580 = vmatpush.msra.mxu0 0.0
        %581 = vmatpush.msra.mxu0 0.0
        %582 = vmatpush.msra.mxu0 0.0
        %583 = vmatpush.msra.mxu0 0.0
        %584 = vmatpush.msra.mxu0 0.0
        %v585 = vand.u32 %v460, 4294901760
        %v586 = vsub.f32 %v460, %v585
        %587 = vmatpush.msra.mxu0 %v586
        %v588 = vand.u32 %v471, 4294901760
        %v589 = vsub.f32 %v471, %v588
        %590 = vmatmul.f32.gmra.mxu0 %v589
        %v591 = vpop.f32.mrf.mxu0
        %v592 = vadd.f32 %v556, %v591
        %v593 = vand.u32 %v474, 4294901760
        %v594 = vsub.f32 %v474, %v593
        %595 = vmatmul.f32.gmra.mxu0 %v594
        %v596 = vpop.f32.mrf.mxu0
        %v597 = vadd.f32 %v560, %v596
        %v598 = vand.u32 %v477, 4294901760
        %v599 = vsub.f32 %v477, %v598
        %600 = vmatmul.f32.gmra.mxu0 %v599
        %v601 = vpop.f32.mrf.mxu0
        %v602 = vadd.f32 %v564, %v601
        %v603 = vand.u32 %v480, 4294901760
        %v604 = vsub.f32 %v480, %v603
        %605 = vmatmul.f32.gmra.mxu0 %v604
        %v606 = vpop.f32.mrf.mxu0
        %v607 = vadd.f32 %v568, %v606
        %608 = vdwg.mxu0
        %609 = vmatpush.msra.mxu0 0.0
        %610 = vmatpush.msra.mxu0 0.0
        %611 = vmatpush.msra.mxu0 0.0
        %612 = vmatpush.msra.mxu0 0.0
        %613 = vmatpush.msra.mxu0 0.0
        %614 = vmatpush.msra.mxu0 0.0
        %615 = vmatpush.msra.mxu0 0.0
        %616 = vmatpush.msra.mxu0 0.0
        %617 = vmatpush.msra.mxu0 0.0
        %618 = vmatpush.msra.mxu0 0.0
        %619 = vmatpush.msra.mxu0 0.0
        %620 = vmatpush.msra.mxu0 0.0
        %621 = vmatpush.msra.mxu0 0.0
        %622 = vmatpush.msra.mxu0 0.0
        %623 = vmatpush.msra.mxu0 0.0
        %v624 = vand.u32 %v460, 4294901760
        %625 = vmatpush.msra.mxu0 %v624
        %v626 = vand.u32 %v471, 4294901760
        %v627 = vsub.f32 %v471, %v626
        %v628 = vand.u32 %v627, 4294901760
        %629 = vmatmul.f32.gmra.mxu0 %v628
        %v630 = vpop.f32.mrf.mxu0
        %v631 = vadd.f32 %v592, %v630
        %v632 = vand.u32 %v474, 4294901760
        %v633 = vsub.f32 %v474, %v632
        %v634 = vand.u32 %v633, 4294901760
        %635 = vmatmul.f32.gmra.mxu0 %v634
        %v636 = vpop.f32.mrf.mxu0
        %v637 = vadd.f32 %v597, %v636
        %v638 = vand.u32 %v477, 4294901760
        %v639 = vsub.f32 %v477, %v638
        %v640 = vand.u32 %v639, 4294901760
        %641 = vmatmul.f32.gmra.mxu0 %v640
        %v642 = vpop.f32.mrf.mxu0
        %v643 = vadd.f32 %v602, %v642
        %v644 = vand.u32 %v480, 4294901760
        %v645 = vsub.f32 %v480, %v644
        %v646 = vand.u32 %v645, 4294901760
        %647 = vmatmul.f32.gmra.mxu0 %v646
        %v648 = vpop.f32.mrf.mxu0
        %v649 = vadd.f32 %v607, %v648
        %650 = vdwg.mxu0
        %651 = vmatpush.msra.mxu0 0.0
        %652 = vmatpush.msra.mxu0 0.0
        %653 = vmatpush.msra.mxu0 0.0
        %654 = vmatpush.msra.mxu0 0.0
        %655 = vmatpush.msra.mxu0 0.0
        %656 = vmatpush.msra.mxu0 0.0
        %657 = vmatpush.msra.mxu0 0.0
        %658 = vmatpush.msra.mxu0 0.0
        %659 = vmatpush.msra.mxu0 0.0
        %660 = vmatpush.msra.mxu0 0.0
        %661 = vmatpush.msra.mxu0 0.0
        %662 = vmatpush.msra.mxu0 0.0
        %663 = vmatpush.msra.mxu0 0.0
        %664 = vmatpush.msra.mxu0 0.0
        %665 = vmatpush.msra.mxu0 0.0
        %v666 = vand.u32 %v460, 4294901760
        %v667 = vsub.f32 %v460, %v666
        %v668 = vand.u32 %v667, 4294901760
        %669 = vmatpush.msra.mxu0 %v668
        %v670 = vand.u32 %v471, 4294901760
        %671 = vmatmul.f32.gmra.mxu0 %v670
        %v672 = vpop.f32.mrf.mxu0
        %v673 = vadd.f32 %v631, %v672
        %v674 = vand.u32 %v474, 4294901760
        %675 = vmatmul.f32.gmra.mxu0 %v674
        %v676 = vpop.f32.mrf.mxu0
        %v677 = vadd.f32 %v637, %v676
        %v678 = vand.u32 %v477, 4294901760
        %679 = vmatmul.f32.gmra.mxu0 %v678
        %v680 = vpop.f32.mrf.mxu0
        %v681 = vadd.f32 %v643, %v680
        %v682 = vand.u32 %v480, 4294901760
        %683 = vmatmul.f32.gmra.mxu0 %v682
        %v684 = vpop.f32.mrf.mxu0
        %v685 = vadd.f32 %v649, %v684
        %686 = vdwg.mxu0
        %687 = vmatpush.msra.mxu0 0.0
        %688 = vmatpush.msra.mxu0 0.0
        %689 = vmatpush.msra.mxu0 0.0
        %690 = vmatpush.msra.mxu0 0.0
        %691 = vmatpush.msra.mxu0 0.0
        %692 = vmatpush.msra.mxu0 0.0
        %693 = vmatpush.msra.mxu0 0.0
        %694 = vmatpush.msra.mxu0 0.0
        %695 = vmatpush.msra.mxu0 0.0
        %696 = vmatpush.msra.mxu0 0.0
        %697 = vmatpush.msra.mxu0 0.0
        %698 = vmatpush.msra.mxu0 0.0
        %699 = vmatpush.msra.mxu0 0.0
        %700 = vmatpush.msra.mxu0 0.0
        %701 = vmatpush.msra.mxu0 0.0
        %v702 = vand.u32 %v460, 4294901760
        %703 = vmatpush.msra.mxu0 %v702
        %v704 = vand.u32 %v471, 4294901760
        %705 = vmatmul.f32.gmra.mxu0 %v704
        %v706 = vpop.f32.mrf.mxu0
        %v707 = vadd.f32 %v673, %v706
        %v708 = vand.u32 %v474, 4294901760
        %709 = vmatmul.f32.gmra.mxu0 %v708
        %v710 = vpop.f32.mrf.mxu0
        %v711 = vadd.f32 %v677, %v710
        %v712 = vand.u32 %v477, 4294901760
        %713 = vmatmul.f32.gmra.mxu0 %v712
        %v714 = vpop.f32.mrf.mxu0
        %v715 = vadd.f32 %v681, %v714
        %v716 = vand.u32 %v480, 4294901760
        %717 = vmatmul.f32.gmra.mxu0 %v716
        %v718 = vpop.f32.mrf.mxu0
        %v719 = vadd.f32 %v685, %v718
        %720 = vdwg.mxu0
        %v721 = vsub.f32 0.0, %v707
        %v722 = vsub.f32 0.0, %v711
        %v723 = vsub.f32 0.0, %v715
        %v724 = vsub.f32 0.0, %v719
        %v725 = vmul.f32 %v721, 1.442695
        %v726 = vpow.pop %v725
        %v727 = vmul.f32 %v722, 1.442695
        %v728 = vpow.pop %v727
        %v729 = vmul.f32 %v723, 1.442695
        %v730 = vpow.pop %v729
        %v731 = vmul.f32 %v724, 1.442695
        %v732 = vpow.pop %v731
        %v733 = vadd.f32 %v726, 1.0
        %v734 = vadd.f32 %v728, 1.0
        %v735 = vadd.f32 %v730, 1.0
        %v736 = vadd.f32 %v732, 1.0
        %v737 = vrcp.pop %v733
        %v738 = vmul.f32 %v733, %v737
        %v739 = vsub.f32 1.0, %v738
        %v740 = vmul.f32 %v737, %v739
        %v741 = vadd.f32 %v737, %v740
        %vm742 = vweird.f32 %v733
        %vm743 = vweird.f32 %v737
        %vm744 = vmor %vm742, %vm743
        %v745 = vsel %vm744, %v737, %v741
        %v746 = vand.u32 2147483647, %v733
        %vm747 = vcmp.eq.f32.partialorder %v746, 8.507059e+37
        %v748 = vand.u32 %v733, 2147483648
        %v749 = vor.u32 1.1754944e-38, %v748
        %v750 = vsel %vm747, %v749, %v745
        %v751 = vmul.f32 1.0, %v750
        %v752 = vrcp.pop %v734
        %v753 = vmul.f32 %v734, %v752
        %v754 = vsub.f32 1.0, %v753
        %v755 = vmul.f32 %v752, %v754
        %v756 = vadd.f32 %v752, %v755
        %vm757 = vweird.f32 %v734
        %vm758 = vweird.f32 %v752
        %vm759 = vmor %vm757, %vm758
        %v760 = vsel %vm759, %v752, %v756
        %v761 = vand.u32 2147483647, %v734
        %vm762 = vcmp.eq.f32.partialorder %v761, 8.507059e+37
        %v763 = vand.u32 %v734, 2147483648
        %v764 = vor.u32 1.1754944e-38, %v763
        %v765 = vsel %vm762, %v764, %v760
        %v766 = vmul.f32 1.0, %v765
        %v767 = vrcp.pop %v735
        %v768 = vmul.f32 %v735, %v767
        %v769 = vsub.f32 1.0, %v768
        %v770 = vmul.f32 %v767, %v769
        %v771 = vadd.f32 %v767, %v770
        %vm772 = vweird.f32 %v735
        %vm773 = vweird.f32 %v767
        %vm774 = vmor %vm772, %vm773
        %v775 = vsel %vm774, %v767, %v771
        %v776 = vand.u32 2147483647, %v735
        %vm777 = vcmp.eq.f32.partialorder %v776, 8.507059e+37
        %v778 = vand.u32 %v735, 2147483648
        %v779 = vor.u32 1.1754944e-38, %v778
        %v780 = vsel %vm777, %v779, %v775
        %v781 = vmul.f32 1.0, %v780
        %v782 = vrcp.pop %v736
        %v783 = vmul.f32 %v736, %v782
        %v784 = vsub.f32 1.0, %v783
        %v785 = vmul.f32 %v782, %v784
        %v786 = vadd.f32 %v782, %v785
        %vm787 = vweird.f32 %v736
        %vm788 = vweird.f32 %v782
        %vm789 = vmor %vm787, %vm788
        %v790 = vsel %vm789, %v782, %v786
        %v791 = vand.u32 2147483647, %v736
        %vm792 = vcmp.eq.f32.partialorder %v791, 8.507059e+37
        %v793 = vand.u32 %v736, 2147483648
        %v794 = vor.u32 1.1754944e-38, %v793
        %v795 = vsel %vm792, %v794, %v790
        %v796 = vmul.f32 1.0, %v795
        %798 = vset.pattern.permute.xlu0 0
        %799 = vperm.xlu0 %798, %v751
        %v800 = vpop.permute.xlu0 %799
        %803 = vset.pattern.permute.xlu0 0
        %804 = vperm.xlu0 %803, %v766
        %v805 = vpop.permute.xlu0 %804
        %808 = vset.pattern.permute.xlu0 0
        %809 = vperm.xlu0 %808, %v781
        %v810 = vpop.permute.xlu0 %809
        %813 = vset.pattern.permute.xlu0 0
        %814 = vperm.xlu0 %813, %v796
        %v815 = vpop.permute.xlu0 %814
        %v817 = vmul.f32 %v245, %v800
        %v818 = vmul.f32 %v246, %v800
        %v819 = vmul.f32 %v247, %v805
        %v820 = vmul.f32 %v248, %v805
        %v821 = vmul.f32 %v249, %v810
        %v822 = vmul.f32 %v250, %v810
        %v823 = vmul.f32 %v251, %v815
        %v824 = vmul.f32 %v252, %v815
        %825 = vst [vmem:[%s244] sm:$0xff] %v817
        %826 = vst [vmem:[%s244 + $0x8] sm:$0xff] %v818
        %827 = vst [vmem:[%s244 + $0x10] sm:$0xff] %v819
        %828 = vst [vmem:[%s244 + $0x18] sm:$0xff] %v820
        %829 = vst [vmem:[%s244 + $0x20] sm:$0xff] %v821
        %830 = vst [vmem:[%s244 + $0x28] sm:$0xff] %v822
        %831 = vst [vmem:[%s244 + $0x30] sm:$0xff] %v823
        %832 = vst [vmem:[%s244 + $0x38] sm:$0xff] %v824
        %s833 = sand.u32 %s140, 1
        %s834 = scalar_lea.sflag [#allocation4], %s833
        %s835 = sand.u32 %s140, 1
        %s836 = smul.addr %s835, 64
        %s837 = scalar_lea.vmem [#allocation5], %s836
        // Predicated region
        $region45: #{tpu_custom_call.1} parent=39 // pred_check
          %p838 = pneg %p150
        $region46: #{tpu_custom_call.1} parent=39 // pred_check_branch
          %840 = sbr.rel (%p838) target = $region48
        $region47: #{tpu_custom_call.1} parent=39 // pred_region
          %842 = vsyncadd %s834, 0
          %s843 = smul.addr %s22, 8
          %s844 = smul.addr %s843, 8
          %s845 = scalar_lea.hbm %s5, %s844
          %s846 = sshll.u32 %s837, 4
          %s847 = int_to_ptr.vmem [resolvable:$true] %s846
          %s848 = sshll.u32 %s845, 4
          %s849 = int_to_ptr.hbm [resolvable:$true] %s848
          %854 = dma.vmem_to_hbm [thread:$0]  %s847, 1024, %s849, %s834, 256, 256, 16
        $region48: #{tpu_custom_call.1} parent=39 // pred_fallthru
          _
      $region40: #{tpu_custom_call.1} parent=5 // pred_fallthru
        _
      %p855 = scmp.le.s32.totalorder 2, %s17
      // Predicated region
      $region49: #{tpu_custom_call.1} parent=5 // pred_check
        %p856 = pneg %p855
      $region50: #{tpu_custom_call.1} parent=5 // pred_check_branch
        %858 = sbr.rel (%p856) target = $region52
      $region51: #{tpu_custom_call.1} parent=5 // pred_region
        %s859 = ssub.s32 %s17, 2
        // Predicated region
        $region53: #{tpu_custom_call.1} parent=51 // pred_check
          %p860 = pneg %p156
        $region54: #{tpu_custom_call.1} parent=51 // pred_check_branch
          %862 = sbr.rel (%p860) target = $region56
        $region55: #{tpu_custom_call.1} parent=51 // pred_region
          %s863 = sand.u32 %s141, 1
          %s864 = scalar_lea.sflag [#allocation4], %s863
          %s865 = sand.u32 %s141, 1
          %s866 = smul.addr %s865, 64
          %s867 = scalar_lea.vmem [#allocation5], %s866
          %869 = dma.done %s864, 1024
        $region56: #{tpu_custom_call.1} parent=51 // pred_fallthru
          _
      $region52: #{tpu_custom_call.1} parent=5 // pred_fallthru
        _
    $region6: #{tpu_custom_call.1} parent=1 // loop_footer
      %s21 = sadd.s32 1, %s17
    $region7: #{tpu_custom_call.1} parent=1 // loop_footer_branch
      %16 = sbr.rel target = $region3
    $region8: #{tpu_custom_call.1} parent=1 // loop_exit
      _
    %870 = vsyncpa [#allocation3], 1
    %s871 = scalar_lea.sflag [#allocation3], 1
    %872 = vsyncpa %s871, 1
    %873 = vsyncpa [#allocation4], 1
    %s874 = scalar_lea.sflag [#allocation4], 1
    %875 = vsyncpa %s874, 1

</llo_original>
